<compile_context>
chip_gen: v7x
topology: tpu7x:2x2x1
jax: 0.10.0
libtpu: 0.0.40
codegen_flags: <defaults>
</compile_context>

<pallas_src>
import jax
import jax.numpy as jnp
from jax import lax
from jax.experimental import pallas as pl
from jax.experimental.pallas import tpu as pltpu

EPS = 1e-5  # PyTorch BatchNorm2d default eps

# dot_general dimension numbers for "lhs @ rhs.T": contract dim 1 of both operands.
_DN_T = (((1,), (1,)), ((), ()))


def resv2_forward(x_nchw, params, *, kernel_size, stride, padding):
    """Pallas TPU forward of ResV2Layer. x_nchw is NCHW; returns NCHW."""
    N, CIN, H, W = x_nchw.shape
    K, S, P = kernel_size, stride, padding
    COUT = params["c1"].shape[-1]
    HO = (H + 2 * P - K) // S + 1
    WO = (W + 2 * P - K) // S + 1
    assert (HO + 2 * P - K + 1, WO + 2 * P - K + 1) == (HO, WO), \
        "conv2 (stride 1) must preserve spatial dims for the residual add"
    M1 = HO * WO
    KC1 = K * K * CIN
    KC2 = K * K * COUT

    # NHWC activations inside the kernels (channels minor -> simple per-channel BN
    # and contiguous im2col taps).  Output comes back channel-major, already NCHW.
    x = jnp.transpose(x_nchw, (0, 2, 3, 1)).astype(jnp.float32)          # (N,H,W,CIN)

    # Weights reshaped for the im2col matmuls; bf16 operands, f32 accumulation.
    w1m = params["w1"].reshape(KC1, COUT).astype(jnp.bfloat16)           # (K*K*CIN, COUT)
    w2m = jnp.transpose(params["w2"].reshape(KC2, COUT)).astype(jnp.bfloat16)  # (COUT, K*K*COUT)
    wsm = jnp.transpose(params["ws"]).astype(jnp.bfloat16)               # (COUT, CIN)
    bias2 = jnp.transpose(params["c2"] + params["cs"])                   # (COUT, 1), f32

    parallel = pltpu.CompilerParams(dimension_semantics=("parallel",))

    # ---------------- stage 0: per-sample partial BN0 statistics ----------------
    def x0_stats_kernel(x_ref, s_ref, q_ref):
        xv = x_ref[0].reshape(H * W, CIN)                 # f32, minor-dim preserving
        s_ref[0] = jnp.sum(xv, axis=0, keepdims=True)
        q_ref[0] = jnp.sum(xv * xv, axis=0, keepdims=True)

    x_sum, x_sqs = pl.pallas_call(
        x0_stats_kernel,
        grid=(N,),
        in_specs=[pl.BlockSpec((1, H, W, CIN), lambda n: (n, 0, 0, 0))],
        out_specs=(pl.BlockSpec((1, 1, CIN), lambda n: (n, 0, 0)),
                   pl.BlockSpec((1, 1, CIN), lambda n: (n, 0, 0))),
        out_shape=(jax.ShapeDtypeStruct((N, 1, CIN), jnp.float32),
                   jax.ShapeDtypeStruct((N, 1, CIN), jnp.float32)),
        compiler_params=parallel,
    )(x)

    cnt0 = float(N * H * W)
    mu0 = jnp.sum(x_sum, axis=0) / cnt0                                   # (1, CIN)
    var0 = jnp.sum(x_sqs, axis=0) / cnt0 - mu0 * mu0
    sc0 = params["g0"] * lax.rsqrt(var0 + EPS)                            # (1, CIN)
    sh0 = params["b0"] - mu0 * sc0

    # ------- stage 1: BN0 apply + ReLU + conv1 (im2col) + partial BN1 stats -------
    def conv1_kernel(x_ref, sc_ref, sh_ref, w_ref, b_ref,
                     z_ref, zs_ref, zq_ref, pad_ref, col_ref):
        # BN0 as a precomputed scale/shift FMA + ReLU, kept in f32 (v5e VPU has no bf16).
        a = jnp.maximum(x_ref[0].reshape(H * W, CIN) * sc_ref[...] + sh_ref[...], 0.0)

        # Padded activation: zero only the halo bands, write the interior once.
        if P > 0:
            pad_ref[0:P, :, :] = jnp.zeros((P, W + 2 * P, CIN), jnp.float32)
            pad_ref[P + H:, :, :] = jnp.zeros((P, W + 2 * P, CIN), jnp.float32)
            pad_ref[P:P + H, 0:P, :] = jnp.zeros((H, P, CIN), jnp.float32)
            pad_ref[P:P + H, P + W:, :] = jnp.zeros((H, P, CIN), jnp.float32)
        pad_ref[P:P + H, P:P + W, :] = a.reshape(H, W, CIN)
        p = pad_ref[...]

        # im2col: pack the K*K taps into one (HO*WO, K*K*CIN) matrix -> single matmul.
        for dh in range(K):
            for dw in range(K):
                sl = p[dh:dh + S * (HO - 1) + 1:S, dw:dw + S * (WO - 1) + 1:S, :]
                c0 = (dh * K + dw) * CIN
                col_ref[:, c0:c0 + CIN] = sl.reshape(M1, CIN)

        z = jnp.dot(col_ref[...].astype(jnp.bfloat16), w_ref[...],
                    preferred_element_type=jnp.float32) + b_ref[...]       # (M1, COUT) f32
        z_ref[0] = z
        # one-pass partial stats for conv1's BatchNorm (f32 accumulation)
        zs_ref[0] = jnp.sum(z, axis=0, keepdims=True)
        zq_ref[0] = jnp.sum(z * z, axis=0, keepdims=True)

    z1, z_sum, z_sqs = pl.pallas_call(
        conv1_kernel,
        grid=(N,),
        in_specs=[
            pl.BlockSpec((1, H, W, CIN), lambda n: (n, 0, 0, 0)),
            pl.BlockSpec((1, CIN), lambda n: (0, 0)),
            pl.BlockSpec((1, CIN), lambda n: (0, 0)),
            pl.BlockSpec((KC1, COUT), lambda n: (0, 0)),
            pl.BlockSpec((1, COUT), lambda n: (0, 0)),
        ],
        out_specs=(
            pl.BlockSpec((1, M1, COUT), lambda n: (n, 0, 0)),
            pl.BlockSpec((1, 1, COUT), lambda n: (n, 0, 0)),
            pl.BlockSpec((1, 1, COUT), lambda n: (n, 0, 0)),
        ),
        out_shape=(
            jax.ShapeDtypeStruct((N, M1, COUT), jnp.float32),
            jax.ShapeDtypeStruct((N, 1, COUT), jnp.float32),
            jax.ShapeDtypeStruct((N, 1, COUT), jnp.float32),
        ),
        scratch_shapes=[
            pltpu.VMEM((H + 2 * P, W + 2 * P, CIN), jnp.float32),
            pltpu.VMEM((M1, KC1), jnp.float32),
        ],
        compiler_params=parallel,
    )(x, sc0, sh0, w1m, params["c1"])

    cnt1 = float(N * M1)
    mu1 = jnp.sum(z_sum, axis=0) / cnt1                                   # (1, COUT)
    var1 = jnp.sum(z_sqs, axis=0) / cnt1 - mu1 * mu1
    sc1 = params["g1"] * lax.rsqrt(var1 + EPS)
    sh1 = params["b1"] - mu1 * sc1

    # ----- stage 2: BN1 apply + ReLU + conv2 (im2col) + fused 1x1 skip + output -----
    def conv2_kernel(z_ref, x_ref, sc_ref, sh_ref, w_ref, ws_ref, b_ref,
                     o_ref, pad_ref, col_ref):
        y1 = jnp.maximum(z_ref[0] * sc_ref[...] + sh_ref[...], 0.0)        # (M1, COUT)

        if P > 0:
            pad_ref[0:P, :, :] = jnp.zeros((P, WO + 2 * P, COUT), jnp.float32)
            pad_ref[P + HO:, :, :] = jnp.zeros((P, WO + 2 * P, COUT), jnp.float32)
            pad_ref[P:P + HO, 0:P, :] = jnp.zeros((HO, P, COUT), jnp.float32)
            pad_ref[P:P + HO, P + WO:, :] = jnp.zeros((HO, P, COUT), jnp.float32)
        pad_ref[P:P + HO, P:P + WO, :] = y1.reshape(HO, WO, COUT)
        p = pad_ref[...]

        for dh in range(K):
            for dw in range(K):
                sl = p[dh:dh + HO, dw:dw + WO, :]
                c0 = (dh * K + dw) * COUT
                col_ref[:, c0:c0 + COUT] = sl.reshape(M1, COUT)

        # conv2 as one matmul producing (COUT, HO*WO): the output stays lane-dense
        # (last dim a multiple of 128) so the final stores are unmasked.
        acc = lax.dot_general(w_ref[...], col_ref[...].astype(jnp.bfloat16), _DN_T,
                              preferred_element_type=jnp.float32)          # (COUT, M1)
        # 1x1 skip conv (stride S) fused into the same f32 accumulator.
        xs = x_ref[0][0:S * (HO - 1) + 1:S, 0:S * (WO - 1) + 1:S, :].reshape(M1, CIN)
        acc = acc + lax.dot_general(ws_ref[...], xs.astype(jnp.bfloat16), _DN_T,
                                    preferred_element_type=jnp.float32)
        o_ref[0] = acc + b_ref[...]                                        # + (c2 + cs)

    out_flat = pl.pallas_call(
        conv2_kernel,
        grid=(N,),
        in_specs=[
            pl.BlockSpec((1, M1, COUT), lambda n: (n, 0, 0)),
            pl.BlockSpec((1, H, W, CIN), lambda n: (n, 0, 0, 0)),
            pl.BlockSpec((1, COUT), lambda n: (0, 0)),
            pl.BlockSpec((1, COUT), lambda n: (0, 0)),
            pl.BlockSpec((COUT, KC2), lambda n: (0, 0)),
            pl.BlockSpec((COUT, CIN), lambda n: (0, 0)),
            pl.BlockSpec((COUT, 1), lambda n: (0, 0)),
        ],
        out_specs=pl.BlockSpec((1, COUT, M1), lambda n: (n, 0, 0)),
        out_shape=jax.ShapeDtypeStruct((N, COUT, M1), jnp.float32),
        scratch_shapes=[
            pltpu.VMEM((HO + 2 * P, WO + 2 * P, COUT), jnp.float32),
            pltpu.VMEM((M1, KC2), jnp.float32),
        ],
        compiler_params=parallel,
    )(z1, x, sc1, sh1, w2m, wsm, bias2)

    # (N, COUT, HO*WO) is already NCHW-flat; only a cheap reshape remains.
    return out_flat.reshape(N, COUT, HO, WO)


def init_params(key, chIn, chOut, kernel_size, stride):
    """Deterministic synthetic parameters with the shapes ResV2Layer.__init__ creates."""
    keys = jax.random.split(key, 10)
    K = kernel_size

    def normal(k, shape, std=0.1):
        return std * jax.random.normal(k, shape, jnp.float32)

    params = {
        # BatchNorm affine params (nn.BatchNorm2d weight/bias)
        "g0": 1.0 + normal(keys[0], (1, chIn)),
        "b0": normal(keys[1], (1, chIn)),
        "g1": 1.0 + normal(keys[2], (1, chOut)),
        "b1": normal(keys[3], (1, chOut)),
        # conv weights: drawn in PyTorch OIHW layout, stored as HWIO for the kernel
        "w1": jnp.transpose(normal(keys[4], (chOut, chIn, K, K)), (2, 3, 1, 0)),
        "c1": normal(keys[5], (1, chOut)),
        "w2": jnp.transpose(normal(keys[6], (chOut, chOut, K, K)), (2, 3, 1, 0)),
        "c2": normal(keys[7], (1, chOut)),
    }
    if chIn != chOut or stride > 1:
        ws_oihw = normal(keys[8], (chOut, chIn, 1, 1))
        params["ws"] = jnp.transpose(ws_oihw[:, :, 0, 0], (1, 0))   # (CIN, COUT)
        params["cs"] = normal(keys[9], (1, chOut))
    else:
        # nn.Identity skip expressed as a 1x1 identity conv with zero bias
        params["ws"] = jnp.eye(chIn, dtype=jnp.float32)
        params["cs"] = jnp.zeros((1, chOut), jnp.float32)
    return params


def ref_forward(x_nchw, params, *, kernel_size, stride, padding):
    """Pure-JAX reference (same math, using lax.conv_general_dilated, f32)."""
    x0 = jnp.transpose(x_nchw, (0, 2, 3, 1)).astype(jnp.float32)
    S, P = stride, padding

    def bn_train(x, g, b):
        mu = jnp.mean(x, axis=(0, 1, 2), keepdims=True)
        var = jnp.mean((x - mu) ** 2, axis=(0, 1, 2), keepdims=True)
        return (x - mu) * lax.rsqrt(var + EPS) * g.reshape(1, 1, 1, -1) + b.reshape(1, 1, 1, -1)

    def conv(x, w, s, p):
        return lax.conv_general_dilated(
            x, w, (s, s), [(p, p), (p, p)],
            dimension_numbers=("NHWC", "HWIO", "NHWC"))

    a = jnp.maximum(bn_train(x0, params["g0"], params["b0"]), 0.0)
    z1 = conv(a, params["w1"], S, P) + params["c1"].reshape(1, 1, 1, -1)
    y1 = jnp.maximum(bn_train(z1, params["g1"], params["b1"]), 0.0)
    y2 = conv(y1, params["w2"], 1, P) + params["c2"].reshape(1, 1, 1, -1)
    sk = conv(x0, params["ws"][None, None], S, 0) + params["cs"].reshape(1, 1, 1, -1)
    return jnp.transpose(y2 + sk, (0, 3, 1, 2))


if __name__ == "__main__":
    N, chIn, chOut, H, W = 2, 4, 8, 16, 16
    K, S, P = 3, 1, 1  # kernel, stride, padding (chIn != chOut -> skip is a 1x1 conv)

    key = jax.random.PRNGKey(0)
    k_x, k_p = jax.random.split(key)
    x = jax.random.normal(k_x, (N, chIn, H, W), jnp.float32)  # NCHW, like PyTorch
    params = init_params(k_p, chIn, chOut, K, S)

    out = resv2_forward(x, params, kernel_size=K, stride=S, padding=P)
    out = jax.block_until_ready(out)

    ref = ref_forward(x, params, kernel_size=K, stride=S, padding=P)
    assert out.shape == (N, chOut, H, W), out.shape
    err = float(jnp.max(jnp.abs(out - ref)))
    assert err < 5e-2, f"max abs error vs reference too large: {err}"
    print("KERNEL_OK")
</pallas_src>

<mosaic_0001>
module attributes {stable_mosaic.version = 11 : i64} {
  func.func @x0_stats_kernel(%arg0: i32, %arg1: memref<1x16x16x4xf32, #tpu.memory_space<vmem>>, %arg2: memref<1x1x4xf32, #tpu.memory_space<vmem>>, %arg3: memref<1x1x4xf32, #tpu.memory_space<vmem>>) attributes {dimension_semantics = [#tpu.dimension_semantics<parallel>], iteration_bounds = array<i64: 2>, scalar_prefetch = 0 : i64, scratch_operands = 0 : i64, tpu.core_type = #tpu.core_type<tc>, window_params = [{transform_indices = @transform_0, window_bounds = array<i64: 1, 16, 16, 4>}, {transform_indices = @transform_1, window_bounds = array<i64: 1, 1, 4>}, {transform_indices = @transform_2, window_bounds = array<i64: 1, 1, 4>}]} {
    %c0 = arith.constant 0 : index
    %c0_0 = arith.constant 0 : index
    %c0_1 = arith.constant 0 : index
    %c0_2 = arith.constant 0 : index
    %0 = vector.load %arg1[%c0, %c0_0, %c0_1, %c0_2] : memref<1x16x16x4xf32, #tpu.memory_space<vmem>>, vector<1x16x16x4xf32>
    %1 = vector.shape_cast %0 : vector<1x16x16x4xf32> to vector<16x16x4xf32>
    %2 = vector.shape_cast %1 : vector<16x16x4xf32> to vector<256x4xf32>
    %cst = arith.constant dense<0.000000e+00> : vector<4xf32>
    %3 = vector.multi_reduction <add>, %2, %cst [0] : vector<256x4xf32> to vector<4xf32>
    %4 = vector.shape_cast %3 : vector<4xf32> to vector<1x4xf32>
    %c0_3 = arith.constant 0 : index
    %c0_4 = arith.constant 0 : index
    %c0_5 = arith.constant 0 : index
    %5 = vector.load %arg2[%c0_3, %c0_4, %c0_5] : memref<1x1x4xf32, #tpu.memory_space<vmem>>, vector<1x1x4xf32>
    %6 = vector.shape_cast %5 : vector<1x1x4xf32> to vector<1x4xf32>
    %7 = vector.shape_cast %4 : vector<1x4xf32> to vector<1x1x4xf32>
    tpu.vector_store %arg2[%c0_3, %c0_4, %c0_5], %7 {strides = array<i32>} : memref<1x1x4xf32, #tpu.memory_space<vmem>>, vector<1x1x4xf32>,
    %8 = arith.mulf %2, %2 : vector<256x4xf32>
    %cst_6 = arith.constant dense<0.000000e+00> : vector<4xf32>
    %9 = vector.multi_reduction <add>, %8, %cst_6 [0] : vector<256x4xf32> to vector<4xf32>
    %10 = vector.shape_cast %9 : vector<4xf32> to vector<1x4xf32>
    %c0_7 = arith.constant 0 : index
    %c0_8 = arith.constant 0 : index
    %c0_9 = arith.constant 0 : index
    %11 = vector.load %arg3[%c0_7, %c0_8, %c0_9] : memref<1x1x4xf32, #tpu.memory_space<vmem>>, vector<1x1x4xf32>
    %12 = vector.shape_cast %11 : vector<1x1x4xf32> to vector<1x4xf32>
    %13 = vector.shape_cast %10 : vector<1x4xf32> to vector<1x1x4xf32>
    tpu.vector_store %arg3[%c0_7, %c0_8, %c0_9], %13 {strides = array<i32>} : memref<1x1x4xf32, #tpu.memory_space<vmem>>, vector<1x1x4xf32>,
    return
  }
  func.func @transform_0(%arg0: i32) -> (i32, i32, i32, i32) {
    %c0_i32 = arith.constant 0 : i32
    %c0_i32_0 = arith.constant 0 : i32
    %c0_i32_1 = arith.constant 0 : i32
    %c0_i32_2 = arith.constant 0 : i32
    return %arg0, %c0_i32, %c0_i32_0, %c0_i32_1 : i32, i32, i32, i32
  }
  func.func @transform_1(%arg0: i32) -> (i32, i32, i32) {
    %c0_i32 = arith.constant 0 : i32
    %c0_i32_0 = arith.constant 0 : i32
    %c0_i32_1 = arith.constant 0 : i32
    return %arg0, %c0_i32, %c0_i32_0 : i32, i32, i32
  }
  func.func @transform_2(%arg0: i32) -> (i32, i32, i32) {
    %c0_i32 = arith.constant 0 : i32
    %c0_i32_0 = arith.constant 0 : i32
    %c0_i32_1 = arith.constant 0 : i32
    return %arg0, %c0_i32, %c0_i32_0 : i32, i32, i32
  }
}

</mosaic_0001>

<llo_original>
// kernel: tpu_custom_call.1
$region0: #{tpu_custom_call.1}
  #allocation0 [shape = 'u32[]', space=smem, size = 0x4, offset = 0x4, fixed_abs, tag = 'smem constant byte address 0x4 - core index']
  #allocation1 [shape = 'u32[144,128]{1,0:T(1,128)}', space=vmem, size = 0x12000, scoped, tag = 'internal scratch']
  %s0 = inlined_call_operand.vmem [shape: f32[2,16,16,4], index: 0, kind: input, shape index: {}]
  %s1 = inlined_call_operand.hbm [shape: f32[2,1,4], index: 1, kind: output, shape index: {0}]
  %s2 = inlined_call_operand.hbm [shape: f32[2,1,4], index: 2, kind: output, shape index: {1}]
  %3 = xla_tuple %s1, %s2
  %s4 = sld [smem:[#allocation0]]
  $region45: #{tpu_custom_call.1} parent=0
    _
  %s6 = ssub.s32 1, %s4
  %s7 = scalar_select 0, %s6, %s4
  $region1: #{tpu_custom_call.1} parent=0
    #allocation2 [shape = 'u8[1024]{0}', space=vmem, size = 0x400, scoped, tag = 'output window, operand 0']
    #allocation3 [shape = 's32[2]{0}', space=sflag, size = 0x8, scoped, tag = 'scoped memory for tpu_custom_call.1']
    #allocation4 [shape = 'u8[1024]{0}', space=vmem, size = 0x400, scoped, tag = 'output window, operand 1']
    #allocation5 [shape = 's32[2]{0}', space=sflag, size = 0x8, scoped, tag = 'scoped memory for tpu_custom_call.1']
    %8 = vsyncpa [#allocation3], 0
    %s9 = scalar_lea.sflag [#allocation3], 1
    %10 = vsyncpa %s9, 0
    %11 = vsyncpa [#allocation5], 0
    %s12 = scalar_lea.sflag [#allocation5], 1
    %13 = vsyncpa %s12, 0
    loop: start=0, step=1, limit=4
    $region2: #{tpu_custom_call.1} parent=1 // loop_pre_header
      _
    $region3: #{tpu_custom_call.1} parent=1 // loop_header
      %s15 = sphi 0, %s19
      %p16 = scmp.ge.s32.totalorder %s15, 4
      %s25 = sphi 0, %s27
      %s28 = sphi 0, %s25
      %s29 = sphi 0, %s28
      %s45 = sphi 0, %s29
      %s51 = sphi 0, %s53
      %s54 = sphi 0, %s51
      %s55 = sphi 0, %s54
      %s71 = sphi 0, %s55
      %s77 = sphi 0, %s79
      %s80 = sphi 0, %s77
      %s81 = sphi 0, %s80
      %s97 = sphi 0, %s81
    $region4: #{tpu_custom_call.1} parent=1 // loop_header_branch
      %18 = sbr.rel (%p16) target = $region8
    $region5: #{tpu_custom_call.1} parent=1 // loop_body
      %s20 = ssub.s32 %s15, 1
      %s21 = ssub.s32 %s15, 2
      %s22 = sadd.s32 %s15, 1
      %s23 = ssub.s32 %s15, %s22
      %p24 = scmp.eq.s32.totalorder %s23, 0
      %s26 = sadd.s32 %s25, 1
      %s27 = scalar_select %p24, %s25, %s26
      %p30 = pneg %p24
      %p31 = scmp.eq.s32.totalorder %s15, 1
      %p32 = por %p30, %p31
      %p33 = scmp.ne.s32.totalorder %s25, %s28
      %p34 = scmp.eq.s32.totalorder %s15, 0
      %p35 = por %p33, %p34
      %p36 = scmp.ne.s32.totalorder %s25, %s28
      %p37 = scmp.eq.s32.totalorder %s20, 1
      %p38 = por %p36, %p37
      %p39 = scmp.ne.s32.totalorder %s28, %s29
      %p40 = scmp.eq.s32.totalorder %s20, 0
      %p41 = por %p39, %p40
      %p42 = scmp.ne.s32.totalorder %s28, %s29
      %p43 = scmp.eq.s32.totalorder %s21, 1
      %p44 = por %p42, %p43
      %p46 = scmp.ne.s32.totalorder %s29, %s45
      %p47 = scmp.eq.s32.totalorder %s21, 0
      %p48 = por %p46, %p47
      %s49 = ssub.s32 %s15, %s22
      %p50 = scmp.eq.s32.totalorder %s49, 0
      %s52 = sadd.s32 %s51, 1
      %s53 = scalar_select %p50, %s51, %s52
      %p56 = pneg %p50
      %p57 = scmp.eq.s32.totalorder %s15, 1
      %p58 = por %p56, %p57
      %p59 = scmp.ne.s32.totalorder %s51, %s54
      %p60 = scmp.eq.s32.totalorder %s15, 0
      %p61 = por %p59, %p60
      %p62 = scmp.ne.s32.totalorder %s51, %s54
      %p63 = scmp.eq.s32.totalorder %s20, 1
      %p64 = por %p62, %p63
      %p65 = scmp.ne.s32.totalorder %s54, %s55
      %p66 = scmp.eq.s32.totalorder %s20, 0
      %p67 = por %p65, %p66
      %p68 = scmp.ne.s32.totalorder %s54, %s55
      %p69 = scmp.eq.s32.totalorder %s21, 1
      %p70 = por %p68, %p69
      %p72 = scmp.ne.s32.totalorder %s55, %s71
      %p73 = scmp.eq.s32.totalorder %s21, 0
      %p74 = por %p72, %p73
      %s75 = ssub.s32 %s15, %s22
      %p76 = scmp.eq.s32.totalorder %s75, 0
      %s78 = sadd.s32 %s77, 1
      %s79 = scalar_select %p76, %s77, %s78
      %p82 = pneg %p76
      %p83 = scmp.eq.s32.totalorder %s15, 1
      %p84 = por %p82, %p83
      %p85 = scmp.ne.s32.totalorder %s77, %s80
      %p86 = scmp.eq.s32.totalorder %s15, 0
      %p87 = por %p85, %p86
      %p88 = scmp.ne.s32.totalorder %s77, %s80
      %p89 = scmp.eq.s32.totalorder %s20, 1
      %p90 = por %p88, %p89
      %p91 = scmp.ne.s32.totalorder %s80, %s81
      %p92 = scmp.eq.s32.totalorder %s20, 0
      %p93 = por %p91, %p92
      %p94 = scmp.ne.s32.totalorder %s80, %s81
      %p95 = scmp.eq.s32.totalorder %s21, 1
      %p96 = por %p94, %p95
      %p98 = scmp.ne.s32.totalorder %s81, %s97
      %p99 = scmp.eq.s32.totalorder %s21, 0
      %p100 = por %p98, %p99
      %p101 = scmp.le.s32.totalorder 1, %s15
      %p102 = scmp.lt.s32.totalorder %s15, 3
      %p103 = pnand %p101, %p102
      %p104 = pneg %p103
      // Predicated region
      $region9: #{tpu_custom_call.1} parent=5 // pred_check
        _
      $region10: #{tpu_custom_call.1} parent=5 // pred_check_branch
        %106 = sbr.rel (%p103) target = $region12
      $region11: #{tpu_custom_call.1} parent=5 // pred_region
        %s107 = ssub.s32 %s15, 1
      $region12: #{tpu_custom_call.1} parent=5 // pred_fallthru
        _
      %p108 = scmp.lt.s32.totalorder %s15, 2
      // Predicated region
      $region13: #{tpu_custom_call.1} parent=5 // pred_check
        %p109 = pneg %p108
      $region14: #{tpu_custom_call.1} parent=5 // pred_check_branch
        %111 = sbr.rel (%p109) target = $region16
      $region15: #{tpu_custom_call.1} parent=5 // pred_region
        // Predicated region
        $region17: #{tpu_custom_call.1} parent=15 // pred_check
          %p112 = pneg %p35
        $region18: #{tpu_custom_call.1} parent=15 // pred_check_branch
          %114 = sbr.rel (%p112) target = $region20
        $region19: #{tpu_custom_call.1} parent=15 // pred_region
          %p115 = scmp.lt.s32.totalorder %s15, 1
          %s116 = scalar_select %p115, %s15, 1
          %s117 = smul.addr %s116, 32
          %s118 = smul.addr %s117, 8
          %s119 = scalar_lea.vmem %s0, %s118
        $region20: #{tpu_custom_call.1} parent=15 // pred_fallthru
          _
      $region16: #{tpu_custom_call.1} parent=5 // pred_fallthru
        _
      %p120 = scmp.le.s32.totalorder 1, %s15
      %p121 = scmp.lt.s32.totalorder %s15, 3
      %p122 = pnand %p120, %p121
      %p123 = pneg %p122
      // Predicated region
      $region21: #{tpu_custom_call.1} parent=5 // pred_check
        _
      $region22: #{tpu_custom_call.1} parent=5 // pred_check_branch
        %125 = sbr.rel (%p122) target = $region24
      $region23: #{tpu_custom_call.1} parent=5 // pred_region
        %s126 = ssub.s32 %s15, 1
        %p127 = scmp.lt.s32.totalorder %s20, 1
        %s128 = scalar_select %p127, %s20, 1
        %s129 = smul.addr %s128, 32
        %s130 = smul.addr %s129, 8
        %s131 = scalar_lea.vmem %s0, %s130
        %p132 = pneg %p41
        %p133 = pneg %p38
        %p134 = pneg %p67
        %p135 = pneg %p64
        %s136 = sand.u32 %s54, 1
        %s137 = scalar_lea.sflag [#allocation3], %s136
        %s138 = sand.u32 %s54, 1
        %s139 = scalar_lea.vmem [#allocation2], %s138
        %p140 = pneg %p93
        %p141 = pneg %p90
        %s142 = sand.u32 %s80, 1
        %s143 = scalar_lea.sflag [#allocation5], %s142
        %s144 = sand.u32 %s80, 1
        %s145 = scalar_lea.vmem [#allocation4], %s144
        %p146 = scmp.lt.s32.totalorder %s20, 1
        %s147 = scalar_select %p146, %s20, 1
        %s148 = smul.addr %s147, 32
        %s149 = smul.addr %s148, 8
        %s150 = scalar_lea.vmem %s0, %s149
        %v151 = vld [vmem:[%s150] sm:$0xff]
        %v152 = vld [vmem:[%s150 + $0x8] sm:$0xff]
        %v153 = vld [vmem:[%s150 + $0x10] sm:$0xff]
        %v154 = vld [vmem:[%s150 + $0x18] sm:$0xff]
        %v155 = vld [vmem:[%s150 + $0x20] sm:$0xff]
        %v156 = vld [vmem:[%s150 + $0x28] sm:$0xff]
        %v157 = vld [vmem:[%s150 + $0x30] sm:$0xff]
        %v158 = vld [vmem:[%s150 + $0x38] sm:$0xff]
        %v159 = vld [vmem:[%s150 + $0x40] sm:$0xff]
        %v160 = vld [vmem:[%s150 + $0x48] sm:$0xff]
        %v161 = vld [vmem:[%s150 + $0x50] sm:$0xff]
        %v162 = vld [vmem:[%s150 + $0x58] sm:$0xff]
        %v163 = vld [vmem:[%s150 + $0x60] sm:$0xff]
        %v164 = vld [vmem:[%s150 + $0x68] sm:$0xff]
        %v165 = vld [vmem:[%s150 + $0x70] sm:$0xff]
        %v166 = vld [vmem:[%s150 + $0x78] sm:$0xff]
        %v167 = vld [vmem:[%s150 + $0x80] sm:$0xff]
        %v168 = vld [vmem:[%s150 + $0x88] sm:$0xff]
        %v169 = vld [vmem:[%s150 + $0x90] sm:$0xff]
        %v170 = vld [vmem:[%s150 + $0x98] sm:$0xff]
        %v171 = vld [vmem:[%s150 + $0xa0] sm:$0xff]
        %v172 = vld [vmem:[%s150 + $0xa8] sm:$0xff]
        %v173 = vld [vmem:[%s150 + $0xb0] sm:$0xff]
        %v174 = vld [vmem:[%s150 + $0xb8] sm:$0xff]
        %v175 = vld [vmem:[%s150 + $0xc0] sm:$0xff]
        %v176 = vld [vmem:[%s150 + $0xc8] sm:$0xff]
        %v177 = vld [vmem:[%s150 + $0xd0] sm:$0xff]
        %v178 = vld [vmem:[%s150 + $0xd8] sm:$0xff]
        %v179 = vld [vmem:[%s150 + $0xe0] sm:$0xff]
        %v180 = vld [vmem:[%s150 + $0xe8] sm:$0xff]
        %v181 = vld [vmem:[%s150 + $0xf0] sm:$0xff]
        %v182 = vld [vmem:[%s150 + $0xf8] sm:$0xff]
        %vm183 = vcmask 31744
        %v184 = vsel %vm183, %v151, 0.0
        %v185 = vsel %vm183, %v152, 0.0
        %v186 = vadd.f32 %v184, %v185
        %v187 = vsel %vm183, %v153, 0.0
        %v188 = vadd.f32 %v186, %v187
        %v189 = vsel %vm183, %v154, 0.0
        %v190 = vadd.f32 %v188, %v189
        %v191 = vsel %vm183, %v155, 0.0
        %v192 = vadd.f32 %v190, %v191
        %v193 = vsel %vm183, %v156, 0.0
        %v194 = vadd.f32 %v192, %v193
        %v195 = vsel %vm183, %v157, 0.0
        %v196 = vadd.f32 %v194, %v195
        %v197 = vsel %vm183, %v158, 0.0
        %v198 = vadd.f32 %v196, %v197
        %v199 = vsel %vm183, %v159, 0.0
        %v200 = vadd.f32 %v198, %v199
        %v201 = vsel %vm183, %v160, 0.0
        %v202 = vadd.f32 %v200, %v201
        %v203 = vsel %vm183, %v161, 0.0
        %v204 = vadd.f32 %v202, %v203
        %v205 = vsel %vm183, %v162, 0.0
        %v206 = vadd.f32 %v204, %v205
        %v207 = vsel %vm183, %v163, 0.0
        %v208 = vadd.f32 %v206, %v207
        %v209 = vsel %vm183, %v164, 0.0
        %v210 = vadd.f32 %v208, %v209
        %v211 = vsel %vm183, %v165, 0.0
        %v212 = vadd.f32 %v210, %v211
        %v213 = vsel %vm183, %v166, 0.0
        %v214 = vadd.f32 %v212, %v213
        %v215 = vsel %vm183, %v167, 0.0
        %v216 = vadd.f32 %v214, %v215
        %v217 = vsel %vm183, %v168, 0.0
        %v218 = vadd.f32 %v216, %v217
        %v219 = vsel %vm183, %v169, 0.0
        %v220 = vadd.f32 %v218, %v219
        %v221 = vsel %vm183, %v170, 0.0
        %v222 = vadd.f32 %v220, %v221
        %v223 = vsel %vm183, %v171, 0.0
        %v224 = vadd.f32 %v222, %v223
        %v225 = vsel %vm183, %v172, 0.0
        %v226 = vadd.f32 %v224, %v225
        %v227 = vsel %vm183, %v173, 0.0
        %v228 = vadd.f32 %v226, %v227
        %v229 = vsel %vm183, %v174, 0.0
        %v230 = vadd.f32 %v228, %v229
        %v231 = vsel %vm183, %v175, 0.0
        %v232 = vadd.f32 %v230, %v231
        %v233 = vsel %vm183, %v176, 0.0
        %v234 = vadd.f32 %v232, %v233
        %v235 = vsel %vm183, %v177, 0.0
        %v236 = vadd.f32 %v234, %v235
        %v237 = vsel %vm183, %v178, 0.0
        %v238 = vadd.f32 %v236, %v237
        %v239 = vsel %vm183, %v179, 0.0
        %v240 = vadd.f32 %v238, %v239
        %v241 = vsel %vm183, %v180, 0.0
        %v242 = vadd.f32 %v240, %v241
        %v243 = vsel %vm183, %v181, 0.0
        %v244 = vadd.f32 %v242, %v243
        %v245 = vsel %vm183, %v182, 0.0
        %v246 = vadd.f32 %v244, %v245
        %v247 = vrot.slane %v246, 4
        %v248 = vadd.f32 %v246, %v247
        %v249 = vrot.slane %v248, 2
        %v250 = vadd.f32 %v248, %v249
        %v251 = vrot.slane %v250, 1
        %v252 = vadd.f32 %v250, %v251
        %vm253 = vcmask 24576
        %254 = vst.msk [vmem:[%s139] sm:$0x1] %vm253, %v252
        %v255 = vmul.f32 %v151, %v151
        %v256 = vmul.f32 %v152, %v152
        %v257 = vmul.f32 %v153, %v153
        %v258 = vmul.f32 %v154, %v154
        %v259 = vmul.f32 %v155, %v155
        %v260 = vmul.f32 %v156, %v156
        %v261 = vmul.f32 %v157, %v157
        %v262 = vmul.f32 %v158, %v158
        %v263 = vmul.f32 %v159, %v159
        %v264 = vmul.f32 %v160, %v160
        %v265 = vmul.f32 %v161, %v161
        %v266 = vmul.f32 %v162, %v162
        %v267 = vmul.f32 %v163, %v163
        %v268 = vmul.f32 %v164, %v164
        %v269 = vmul.f32 %v165, %v165
        %v270 = vmul.f32 %v166, %v166
        %v271 = vmul.f32 %v167, %v167
        %v272 = vmul.f32 %v168, %v168
        %v273 = vmul.f32 %v169, %v169
        %v274 = vmul.f32 %v170, %v170
        %v275 = vmul.f32 %v171, %v171
        %v276 = vmul.f32 %v172, %v172
        %v277 = vmul.f32 %v173, %v173
        %v278 = vmul.f32 %v174, %v174
        %v279 = vmul.f32 %v175, %v175
        %v280 = vmul.f32 %v176, %v176
        %v281 = vmul.f32 %v177, %v177
        %v282 = vmul.f32 %v178, %v178
        %v283 = vmul.f32 %v179, %v179
        %v284 = vmul.f32 %v180, %v180
        %v285 = vmul.f32 %v181, %v181
        %v286 = vmul.f32 %v182, %v182
        %v287 = vsel %vm183, %v255, 0.0
        %v288 = vsel %vm183, %v256, 0.0
        %v289 = vadd.f32 %v287, %v288
        %v290 = vsel %vm183, %v257, 0.0
        %v291 = vadd.f32 %v289, %v290
        %v292 = vsel %vm183, %v258, 0.0
        %v293 = vadd.f32 %v291, %v292
        %v294 = vsel %vm183, %v259, 0.0
        %v295 = vadd.f32 %v293, %v294
        %v296 = vsel %vm183, %v260, 0.0
        %v297 = vadd.f32 %v295, %v296
        %v298 = vsel %vm183, %v261, 0.0
        %v299 = vadd.f32 %v297, %v298
        %v300 = vsel %vm183, %v262, 0.0
        %v301 = vadd.f32 %v299, %v300
        %v302 = vsel %vm183, %v263, 0.0
        %v303 = vadd.f32 %v301, %v302
        %v304 = vsel %vm183, %v264, 0.0
        %v305 = vadd.f32 %v303, %v304
        %v306 = vsel %vm183, %v265, 0.0
        %v307 = vadd.f32 %v305, %v306
        %v308 = vsel %vm183, %v266, 0.0
        %v309 = vadd.f32 %v307, %v308
        %v310 = vsel %vm183, %v267, 0.0
        %v311 = vadd.f32 %v309, %v310
        %v312 = vsel %vm183, %v268, 0.0
        %v313 = vadd.f32 %v311, %v312
        %v314 = vsel %vm183, %v269, 0.0
        %v315 = vadd.f32 %v313, %v314
        %v316 = vsel %vm183, %v270, 0.0
        %v317 = vadd.f32 %v315, %v316
        %v318 = vsel %vm183, %v271, 0.0
        %v319 = vadd.f32 %v317, %v318
        %v320 = vsel %vm183, %v272, 0.0
        %v321 = vadd.f32 %v319, %v320
        %v322 = vsel %vm183, %v273, 0.0
        %v323 = vadd.f32 %v321, %v322
        %v324 = vsel %vm183, %v274, 0.0
        %v325 = vadd.f32 %v323, %v324
        %v326 = vsel %vm183, %v275, 0.0
        %v327 = vadd.f32 %v325, %v326
        %v328 = vsel %vm183, %v276, 0.0
        %v329 = vadd.f32 %v327, %v328
        %v330 = vsel %vm183, %v277, 0.0
        %v331 = vadd.f32 %v329, %v330
        %v332 = vsel %vm183, %v278, 0.0
        %v333 = vadd.f32 %v331, %v332
        %v334 = vsel %vm183, %v279, 0.0
        %v335 = vadd.f32 %v333, %v334
        %v336 = vsel %vm183, %v280, 0.0
        %v337 = vadd.f32 %v335, %v336
        %v338 = vsel %vm183, %v281, 0.0
        %v339 = vadd.f32 %v337, %v338
        %v340 = vsel %vm183, %v282, 0.0
        %v341 = vadd.f32 %v339, %v340
        %v342 = vsel %vm183, %v283, 0.0
        %v343 = vadd.f32 %v341, %v342
        %v344 = vsel %vm183, %v284, 0.0
        %v345 = vadd.f32 %v343, %v344
        %v346 = vsel %vm183, %v285, 0.0
        %v347 = vadd.f32 %v345, %v346
        %v348 = vsel %vm183, %v286, 0.0
        %v349 = vadd.f32 %v347, %v348
        %v350 = vrot.slane %v349, 4
        %v351 = vadd.f32 %v349, %v350
        %v352 = vrot.slane %v351, 2
        %v353 = vadd.f32 %v351, %v352
        %v354 = vrot.slane %v353, 1
        %v355 = vadd.f32 %v353, %v354
        %356 = vst.msk [vmem:[%s145] sm:$0x1] %vm253, %v355
        %s357 = sand.u32 %s54, 1
        %s358 = scalar_lea.sflag [#allocation3], %s357
        %s359 = sand.u32 %s54, 1
        %s360 = scalar_lea.vmem [#allocation2], %s359
        %s361 = sand.u32 %s80, 1
        %s362 = scalar_lea.sflag [#allocation5], %s361
        %s363 = sand.u32 %s80, 1
        %s364 = scalar_lea.vmem [#allocation4], %s363
        // Predicated region
        $region25: #{tpu_custom_call.1} parent=23 // pred_check
          %p365 = pneg %p64
        $region26: #{tpu_custom_call.1} parent=23 // pred_check_branch
          %367 = sbr.rel (%p365) target = $region28
        $region27: #{tpu_custom_call.1} parent=23 // pred_region
          %s369 = ssub.s32 16, 16
          %370 = vsyncadd %s358, %s369
          %s371 = smul.addr %s20, 16
          %s372 = scalar_lea.hbm %s1, %s371
          %s374 = sshll.u32 %s360, 4
          %s375 = int_to_ptr.vmem [resolvable:$true] %s374
          %377 = dma.vmem_to_hbm [thread:$0]  %s375, 16, %s372, %s358
        $region28: #{tpu_custom_call.1} parent=23 // pred_fallthru
          _
        // Predicated region
        $region29: #{tpu_custom_call.1} parent=23 // pred_check
          %p378 = pneg %p90
        $region30: #{tpu_custom_call.1} parent=23 // pred_check_branch
          %380 = sbr.rel (%p378) target = $region32
        $region31: #{tpu_custom_call.1} parent=23 // pred_region
          %s382 = ssub.s32 16, 16
          %383 = vsyncadd %s362, %s382
          %s384 = smul.addr %s20, 16
          %s385 = scalar_lea.hbm %s2, %s384
          %s387 = sshll.u32 %s364, 4
          %s388 = int_to_ptr.vmem [resolvable:$true] %s387
          %390 = dma.vmem_to_hbm [thread:$0]  %s388, 16, %s385, %s362
        $region32: #{tpu_custom_call.1} parent=23 // pred_fallthru
          _
      $region24: #{tpu_custom_call.1} parent=5 // pred_fallthru
        _
      %p391 = scmp.le.s32.totalorder 2, %s15
      // Predicated region
      $region33: #{tpu_custom_call.1} parent=5 // pred_check
        %p392 = pneg %p391
      $region34: #{tpu_custom_call.1} parent=5 // pred_check_branch
        %394 = sbr.rel (%p392) target = $region36
      $region35: #{tpu_custom_call.1} parent=5 // pred_region
        %s395 = ssub.s32 %s15, 2
        // Predicated region
        $region37: #{tpu_custom_call.1} parent=35 // pred_check
          %p396 = pneg %p70
        $region38: #{tpu_custom_call.1} parent=35 // pred_check_branch
          %398 = sbr.rel (%p396) target = $region40
        $region39: #{tpu_custom_call.1} parent=35 // pred_region
          %s399 = sand.u32 %s55, 1
          %s400 = scalar_lea.sflag [#allocation3], %s399
          %s401 = sand.u32 %s55, 1
          %s402 = scalar_lea.vmem [#allocation2], %s401
          %403 = dma.done %s400, 16
        $region40: #{tpu_custom_call.1} parent=35 // pred_fallthru
          _
        // Predicated region
        $region41: #{tpu_custom_call.1} parent=35 // pred_check
          %p404 = pneg %p96
        $region42: #{tpu_custom_call.1} parent=35 // pred_check_branch
          %406 = sbr.rel (%p404) target = $region44
        $region43: #{tpu_custom_call.1} parent=35 // pred_region
          %s407 = sand.u32 %s81, 1
          %s408 = scalar_lea.sflag [#allocation5], %s407
          %s409 = sand.u32 %s81, 1
          %s410 = scalar_lea.vmem [#allocation4], %s409
          %411 = dma.done %s408, 16
        $region44: #{tpu_custom_call.1} parent=35 // pred_fallthru
          _
      $region36: #{tpu_custom_call.1} parent=5 // pred_fallthru
        _
    $region6: #{tpu_custom_call.1} parent=1 // loop_footer
      %s19 = sadd.s32 1, %s15
    $region7: #{tpu_custom_call.1} parent=1 // loop_footer_branch
      %14 = sbr.rel target = $region3
    $region8: #{tpu_custom_call.1} parent=1 // loop_exit
      _
    %412 = vsyncpa [#allocation3], 1
    %s413 = scalar_lea.sflag [#allocation3], 1
    %414 = vsyncpa %s413, 1
    %415 = vsyncpa [#allocation5], 1
    %s416 = scalar_lea.sflag [#allocation5], 1
    %417 = vsyncpa %s416, 1

</llo_original>
